<compile_context>
chip_gen: v7x
topology: tpu7x:2x2x1
jax: 0.10.0
libtpu: 0.0.40
codegen_flags: <defaults>
</compile_context>

<pallas_src>
import jax
import jax.numpy as jnp
from jax.experimental import pallas as pl
from jax.experimental.pallas import tpu as pltpu

LANES = 128          # lane width (last dim of every tile)
MAX_TILE_R = 2048    # rows per grid step -> 1 MiB f32 per input tile
NUM_SLOTS = 2        # leading "parallel" axis; core-sharded on v7x (2 TCs)


def _round_up(x, m):
    return ((x + m - 1) // m) * m


def _sublane_multiple(dtype):
    """Native sublane packing for a dtype: 8 for 32-bit, 16 for bf16, 32 for 8-bit."""
    itemsize = jnp.dtype(dtype).itemsize
    return max(8, 32 // max(1, min(4, itemsize)))


def _jaccard_partial_kernel(p_ref, a_ref, out_ref, acc_tp_ref, acc_s_ref):
    """Per-slot streaming reduction.

    Grid = (NUM_SLOTS, tiles_per_slot); axis 1 is the reduction axis.
    Per step only elementwise VALU work (hidden under the input DMA):
        acc_tp += p * a        (true positives)
        acc_s  += p + a        (sum(p) + sum(a))
    The cross-lane/sublane reduction to scalars runs exactly once, on the last
    reduction step, writing (tp, S) into lanes 0/1 of this slot's (8, 128)
    output row-block.
    """
    k = pl.program_id(1)

    @pl.when(k == 0)
    def _():
        acc_tp_ref[...] = jnp.zeros_like(acc_tp_ref)
        acc_s_ref[...] = jnp.zeros_like(acc_s_ref)

    p = p_ref[...].astype(jnp.float32)
    a = a_ref[...].astype(jnp.float32)
    acc_tp_ref[...] += p * a
    acc_s_ref[...] += p + a

    @pl.when(k == pl.num_programs(1) - 1)
    def _():
        tp = jnp.sum(acc_tp_ref[...])
        s = jnp.sum(acc_s_ref[...])
        lane = jax.lax.broadcasted_iota(jnp.int32, out_ref.shape, 1)
        out_ref[...] = jnp.where(lane == 0, tp, jnp.where(lane == 1, s, 0.0))


def jaccard_loss(predicted, actual, smooth=1e-6):
    """Pallas TPU JaccardLoss.forward. Returns a scalar f32."""
    assert predicted.shape == actual.shape, "predicted/actual must have same shape"

    p = predicted.reshape(-1)   # free view; dtype cast happens inside the kernel
    a = actual.reshape(-1)
    n = p.shape[0]

    # Dtype-aware sublane alignment so packed dtypes (bf16 / int8 / fp8) keep
    # their native (sublane, 128) layout inside the kernel.
    sub = max(_sublane_multiple(p.dtype), _sublane_multiple(a.dtype))

    rows = -(-n // LANES)                        # 128-lane rows needed
    per_slot_rows = -(-rows // NUM_SLOTS)
    tile_r = min(MAX_TILE_R, max(sub, _round_up(per_slot_rows, sub)))
    chunk_rows = NUM_SLOTS * tile_r
    padded_rows = _round_up(rows, chunk_rows)
    total = padded_rows * LANES

    # Zero-pad only when the flat size is not already aligned to the grid
    # (padded elements contribute 0 to both accumulators).  Aligned inputs —
    # the common segmentation case — take the copy-free path.
    if total != n:
        p = jnp.pad(p, (0, total - n))
        a = jnp.pad(a, (0, total - n))

    p2 = p.reshape(padded_rows, LANES)
    a2 = a.reshape(padded_rows, LANES)
    tiles_per_slot = padded_rows // chunk_rows

    in_map = lambda c, k: (c * tiles_per_slot + k, 0)

    out = pl.pallas_call(
        _jaccard_partial_kernel,
        out_shape=jax.ShapeDtypeStruct((NUM_SLOTS * 8, LANES), jnp.float32),
        grid_spec=pltpu.PrefetchScalarGridSpec(
            num_scalar_prefetch=0,
            grid=(NUM_SLOTS, tiles_per_slot),
            in_specs=[
                pl.BlockSpec((tile_r, LANES), in_map),
                pl.BlockSpec((tile_r, LANES), in_map),
            ],
            out_specs=pl.BlockSpec((8, LANES), lambda c, k: (c, 0)),
            scratch_shapes=[
                pltpu.VMEM((tile_r, LANES), jnp.float32),  # acc_tp
                pltpu.VMEM((tile_r, LANES), jnp.float32),  # acc_s
            ],
        ),
        compiler_params=pltpu.CompilerParams(
            dimension_semantics=("parallel", "arbitrary"),
        ),
    )(p2, a2)

    # Combine the per-slot partials (each slot wrote tp into lane 0, S into
    # lane 1 of its (8, 128) row-block) and finish the tiny scalar math here.
    partials = out.reshape(NUM_SLOTS, 8, LANES)
    tp = jnp.sum(partials[:, 0, 0])
    s = jnp.sum(partials[:, 0, 1])
    # fp = sum(a) - tp, fn = sum(p) - tp  =>  tp + fp + fn = s - tp
    jaccard_index = (tp + smooth) / (s - tp + smooth)
    return (1.0 - jaccard_index).astype(jnp.float32)


def jaccard_loss_ref(predicted, actual, smooth=1e-6):
    """Pure-JAX reference mirroring the PyTorch module exactly."""
    p = predicted.reshape(-1).astype(jnp.float32)
    a = actual.reshape(-1).astype(jnp.float32)
    tp = jnp.sum(p * a)
    fp = jnp.sum((1.0 - p) * a)
    fn = jnp.sum(p * (1.0 - a))
    jac = (tp + smooth) / (tp + fp + fn + smooth)
    return 1.0 - jac


if __name__ == "__main__":
    key = jax.random.PRNGKey(0)
    k1, k2 = jax.random.split(key)

    # Segmentation-style inputs: NCHW (2, 4, 16, 16)
    predicted = jax.nn.sigmoid(jax.random.normal(k1, (2, 4, 16, 16), jnp.float32))
    actual = jax.random.bernoulli(k2, 0.5, (2, 4, 16, 16)).astype(jnp.float32)

    loss = jax.block_until_ready(jaccard_loss(predicted, actual))
    ref = jax.block_until_ready(jaccard_loss_ref(predicted, actual))

    assert jnp.allclose(loss, ref, rtol=1e-5, atol=1e-6), (loss, ref)
    print("KERNEL_OK")
</pallas_src>

<mosaic_0001>
module attributes {stable_mosaic.version = 11 : i64} {
  func.func @_jaccard_partial_kernel(%arg0: i32, %arg1: i32, %arg2: memref<8x128xf32, #tpu.memory_space<vmem>>, %arg3: memref<8x128xf32, #tpu.memory_space<vmem>>, %arg4: memref<8x128xf32, #tpu.memory_space<vmem>>, %arg5: memref<8x128xf32, #tpu.memory_space<vmem>>, %arg6: memref<8x128xf32, #tpu.memory_space<vmem>>) attributes {dimension_semantics = [#tpu.dimension_semantics<parallel>, #tpu.dimension_semantics<arbitrary>], iteration_bounds = array<i64: 2, 1>, scalar_prefetch = 0 : i64, scratch_operands = 2 : i64, tpu.core_type = #tpu.core_type<tc>, window_params = [{transform_indices = @transform_0, window_bounds = array<i64: 8, 128>}, {transform_indices = @transform_1, window_bounds = array<i64: 8, 128>}, {transform_indices = @transform_2, window_bounds = array<i64: 8, 128>}]} {
    %c0_i32 = arith.constant 0 : i32
    %0 = arith.cmpi eq, %arg1, %c0_i32 : i32
    %1 = arith.extui %0 : i1 to i32
    %c0_i32_0 = arith.constant 0 : i32
    %2 = arith.cmpi ne, %1, %c0_i32_0 : i32
    scf.if %2 {
      %cst = arith.constant 0.000000e+00 : f32
      %16 = vector.broadcast %cst : f32 to vector<8x128xf32>
      %c0_14 = arith.constant 0 : index
      %c0_15 = arith.constant 0 : index
      %17 = vector.load %arg5[%c0_14, %c0_15] : memref<8x128xf32, #tpu.memory_space<vmem>>, vector<8x128xf32>
      tpu.vector_store %arg5[%c0_14, %c0_15], %16 {strides = array<i32>} : memref<8x128xf32, #tpu.memory_space<vmem>>, vector<8x128xf32>,
      %cst_16 = arith.constant 0.000000e+00 : f32
      %18 = vector.broadcast %cst_16 : f32 to vector<8x128xf32>
      %c0_17 = arith.constant 0 : index
      %c0_18 = arith.constant 0 : index
      %19 = vector.load %arg6[%c0_17, %c0_18] : memref<8x128xf32, #tpu.memory_space<vmem>>, vector<8x128xf32>
      tpu.vector_store %arg6[%c0_17, %c0_18], %18 {strides = array<i32>} : memref<8x128xf32, #tpu.memory_space<vmem>>, vector<8x128xf32>,
    } else {
    }
    %c0 = arith.constant 0 : index
    %c0_1 = arith.constant 0 : index
    %3 = vector.load %arg2[%c0, %c0_1] : memref<8x128xf32, #tpu.memory_space<vmem>>, vector<8x128xf32>
    %c0_2 = arith.constant 0 : index
    %c0_3 = arith.constant 0 : index
    %4 = vector.load %arg3[%c0_2, %c0_3] : memref<8x128xf32, #tpu.memory_space<vmem>>, vector<8x128xf32>
    %c0_4 = arith.constant 0 : index
    %c0_5 = arith.constant 0 : index
    %5 = vector.load %arg5[%c0_4, %c0_5] : memref<8x128xf32, #tpu.memory_space<vmem>>, vector<8x128xf32>
    %6 = arith.mulf %3, %4 : vector<8x128xf32>
    %7 = arith.addf %5, %6 : vector<8x128xf32>
    %c0_6 = arith.constant 0 : index
    %c0_7 = arith.constant 0 : index
    %8 = vector.load %arg5[%c0_6, %c0_7] : memref<8x128xf32, #tpu.memory_space<vmem>>, vector<8x128xf32>
    tpu.vector_store %arg5[%c0_6, %c0_7], %7 {strides = array<i32>} : memref<8x128xf32, #tpu.memory_space<vmem>>, vector<8x128xf32>,
    %c0_8 = arith.constant 0 : index
    %c0_9 = arith.constant 0 : index
    %9 = vector.load %arg6[%c0_8, %c0_9] : memref<8x128xf32, #tpu.memory_space<vmem>>, vector<8x128xf32>
    %10 = arith.addf %3, %4 : vector<8x128xf32>
    %11 = arith.addf %9, %10 : vector<8x128xf32>
    %c0_10 = arith.constant 0 : index
    %c0_11 = arith.constant 0 : index
    %12 = vector.load %arg6[%c0_10, %c0_11] : memref<8x128xf32, #tpu.memory_space<vmem>>, vector<8x128xf32>
    tpu.vector_store %arg6[%c0_10, %c0_11], %11 {strides = array<i32>} : memref<8x128xf32, #tpu.memory_space<vmem>>, vector<8x128xf32>,
    %c0_i32_12 = arith.constant 0 : i32
    %13 = arith.cmpi eq, %arg1, %c0_i32_12 : i32
    %14 = arith.extui %13 : i1 to i32
    %c0_i32_13 = arith.constant 0 : i32
    %15 = arith.cmpi ne, %14, %c0_i32_13 : i32
    scf.if %15 {
      %c0_14 = arith.constant 0 : index
      %c0_15 = arith.constant 0 : index
      %16 = vector.load %arg5[%c0_14, %c0_15] : memref<8x128xf32, #tpu.memory_space<vmem>>, vector<8x128xf32>
      %17 = vector.shape_cast %16 : vector<8x128xf32> to vector<1x8x128xf32>
      %cst = arith.constant dense<0.000000e+00> : vector<1xf32>
      %18 = vector.multi_reduction <add>, %17, %cst [1, 2] : vector<1x8x128xf32> to vector<1xf32>
      %19 = vector.shape_cast %18 : vector<1xf32> to vector<1x1x1xf32>
      %20 = vector.extract %19[0, 0, 0] : f32 from vector<1x1x1xf32>
      %c0_16 = arith.constant 0 : index
      %c0_17 = arith.constant 0 : index
      %21 = vector.load %arg6[%c0_16, %c0_17] : memref<8x128xf32, #tpu.memory_space<vmem>>, vector<8x128xf32>
      %22 = vector.shape_cast %21 : vector<8x128xf32> to vector<1x8x128xf32>
      %cst_18 = arith.constant dense<0.000000e+00> : vector<1xf32>
      %23 = vector.multi_reduction <add>, %22, %cst_18 [1, 2] : vector<1x8x128xf32> to vector<1xf32>
      %24 = vector.shape_cast %23 : vector<1xf32> to vector<1x1x1xf32>
      %25 = vector.extract %24[0, 0, 0] : f32 from vector<1x1x1xf32>
      %26 = tpu.iota {dimensions = array<i32: 1>} : vector<8x128xi32>
      %c0_i32_19 = arith.constant 0 : i32
      %27 = vector.broadcast %c0_i32_19 : i32 to vector<8x128xi32>
      %28 = arith.cmpi eq, %26, %27 : vector<8x128xi32>
      %c1_i32 = arith.constant 1 : i32
      %29 = vector.broadcast %c1_i32 : i32 to vector<8x128xi32>
      %30 = arith.cmpi eq, %26, %29 : vector<8x128xi32>
      %cst_20 = arith.constant 0.000000e+00 : f32
      %31 = vector.broadcast %25 : f32 to vector<8x128xf32>
      %32 = vector.broadcast %cst_20 : f32 to vector<8x128xf32>
      %33 = arith.select %30, %31, %32 : vector<8x128xi1>, vector<8x128xf32>
      %34 = vector.broadcast %20 : f32 to vector<8x128xf32>
      %35 = arith.select %28, %34, %33 : vector<8x128xi1>, vector<8x128xf32>
      %c0_21 = arith.constant 0 : index
      %c0_22 = arith.constant 0 : index
      %36 = vector.load %arg4[%c0_21, %c0_22] : memref<8x128xf32, #tpu.memory_space<vmem>>, vector<8x128xf32>
      tpu.vector_store %arg4[%c0_21, %c0_22], %35 {strides = array<i32>} : memref<8x128xf32, #tpu.memory_space<vmem>>, vector<8x128xf32>,
    } else {
    }
    return
  }
  func.func @transform_0(%arg0: i32, %arg1: i32) -> (i32, i32) {
    %c1_i32 = arith.constant 1 : i32
    %0 = arith.muli %arg0, %c1_i32 : i32
    %1 = arith.addi %0, %arg1 : i32
    %c0_i32 = arith.constant 0 : i32
    %c0_i32_0 = arith.constant 0 : i32
    return %1, %c0_i32 : i32, i32
  }
  func.func @transform_1(%arg0: i32, %arg1: i32) -> (i32, i32) {
    %c1_i32 = arith.constant 1 : i32
    %0 = arith.muli %arg0, %c1_i32 : i32
    %1 = arith.addi %0, %arg1 : i32
    %c0_i32 = arith.constant 0 : i32
    %c0_i32_0 = arith.constant 0 : i32
    return %1, %c0_i32 : i32, i32
  }
  func.func @transform_2(%arg0: i32, %arg1: i32) -> (i32, i32) {
    %c0_i32 = arith.constant 0 : i32
    %c0_i32_0 = arith.constant 0 : i32
    return %arg0, %c0_i32 : i32, i32
  }
}

</mosaic_0001>

<llo_original>
// kernel: tpu_custom_call.1
$region0: #{tpu_custom_call.1}
  #allocation0 [shape = 'u32[]', space=smem, size = 0x4, offset = 0x4, fixed_abs, tag = 'smem constant byte address 0x4 - core index']
  #allocation1 [shape = 'u32[144,128]{1,0:T(1,128)}', space=vmem, size = 0x12000, scoped, tag = 'internal scratch']
  #allocation2 [shape = 'f32[8,128]{1,0:T(8,128)}', space=vmem, size = 0x1000, scoped, tag = 'scratch operand']
  #allocation3 [shape = 'f32[8,128]{1,0:T(8,128)}', space=vmem, size = 0x1000, scoped, tag = 'scratch operand']
  %s0 = inlined_call_operand.hbm [shape: f32[16,128], index: 0, kind: input, shape index: {}]
  %s1 = inlined_call_operand.hbm [shape: f32[16,128], index: 1, kind: input, shape index: {}]
  %s2 = inlined_call_operand.hbm [shape: f32[16,128], index: 2, kind: output, shape index: {}]
  %s3 = sld [smem:[#allocation0]]
  $region57: #{tpu_custom_call.1} parent=0
    _
  %s5 = ssub.s32 1, %s3
  %s6 = scalar_select 0, %s5, %s3
  $region1: #{tpu_custom_call.1} parent=0
    #allocation4 [shape = 'u8[8192]{0}', space=vmem, size = 0x2000, scoped, tag = 'input window, operand 0']
    #allocation5 [shape = 's32[2]{0}', space=sflag, size = 0x8, scoped, tag = 'scoped memory for tpu_custom_call.1']
    #allocation6 [shape = 's32[2]{0}', space=sflag, size = 0x8, scoped, tag = 'scoped memory for tpu_custom_call.1']
    #allocation7 [shape = 'u8[8192]{0}', space=vmem, size = 0x2000, scoped, tag = 'input window, operand 1']
    #allocation8 [shape = 's32[2]{0}', space=sflag, size = 0x8, scoped, tag = 'scoped memory for tpu_custom_call.1']
    #allocation9 [shape = 'u8[8192]{0}', space=vmem, size = 0x2000, scoped, tag = 'output window, operand 0']
    %7 = vsyncpa [#allocation5], 0
    %s8 = scalar_lea.sflag [#allocation5], 1
    %9 = vsyncpa %s8, 0
    %10 = vsyncpa [#allocation8], 0
    %s11 = scalar_lea.sflag [#allocation8], 1
    %12 = vsyncpa %s11, 0
    %13 = vsyncpa [#allocation6], 0
    %s14 = scalar_lea.sflag [#allocation6], 1
    %15 = vsyncpa %s14, 0
    loop: start=0, step=1, limit=4
    $region2: #{tpu_custom_call.1} parent=1 // loop_pre_header
      _
    $region3: #{tpu_custom_call.1} parent=1 // loop_header
      %s17 = sphi 0, %s21
      %p18 = scmp.ge.s32.totalorder %s17, 4
      %s24 = sphi 0, %s36
      %s25 = sphi 0, %s32
      %s26 = sphi 0, %s24
      %s27 = sphi 0, %s25
      %s28 = sphi 0, %s26
      %s29 = sphi 0, %s27
      %s41 = sphi 0, %s43
      %s44 = sphi 0, %s41
      %s45 = sphi 0, %s44
      %s61 = sphi 0, %s45
      %s69 = sphi 0, %s71
      %s72 = sphi 0, %s69
      %s73 = sphi 0, %s72
      %s89 = sphi 0, %s73
      %s95 = sphi 0, %s97
      %s98 = sphi 0, %s95
      %s99 = sphi 0, %s98
      %s115 = sphi 0, %s99
    $region4: #{tpu_custom_call.1} parent=1 // loop_header_branch
      %20 = sbr.rel (%p18) target = $region8
    $region5: #{tpu_custom_call.1} parent=1 // loop_body
      %s22 = ssub.s32 %s17, 1
      %s23 = ssub.s32 %s17, 2
      %s30 = sadd.s32 1, %s25
      %p31 = scmp.ge.s32.totalorder %s30, 1
      %s32 = scalar_select %p31, 0, %s30
      %s33 = sadd.s32 1, %s24
      %s34 = scalar_select %p31, %s33, %s24
      %p35 = scmp.ge.s32.totalorder %s34, 2
      %s36 = scalar_select %p35, 0, %s34
      %s37 = sadd.s32 %s24, %s25
      %s38 = sadd.s32 %s36, %s32
      %s39 = ssub.s32 %s37, %s38
      %p40 = scmp.eq.s32.totalorder %s39, 0
      %s42 = sadd.s32 %s41, 1
      %s43 = scalar_select %p40, %s41, %s42
      %p46 = pneg %p40
      %p47 = scmp.eq.s32.totalorder %s17, 1
      %p48 = por %p46, %p47
      %p49 = scmp.ne.s32.totalorder %s41, %s44
      %p50 = scmp.eq.s32.totalorder %s17, 0
      %p51 = por %p49, %p50
      %p52 = scmp.ne.s32.totalorder %s41, %s44
      %p53 = scmp.eq.s32.totalorder %s22, 1
      %p54 = por %p52, %p53
      %p55 = scmp.ne.s32.totalorder %s44, %s45
      %p56 = scmp.eq.s32.totalorder %s22, 0
      %p57 = por %p55, %p56
      %p58 = scmp.ne.s32.totalorder %s44, %s45
      %p59 = scmp.eq.s32.totalorder %s23, 1
      %p60 = por %p58, %p59
      %p62 = scmp.ne.s32.totalorder %s45, %s61
      %p63 = scmp.eq.s32.totalorder %s23, 0
      %p64 = por %p62, %p63
      %s65 = sadd.s32 %s24, %s25
      %s66 = sadd.s32 %s36, %s32
      %s67 = ssub.s32 %s65, %s66
      %p68 = scmp.eq.s32.totalorder %s67, 0
      %s70 = sadd.s32 %s69, 1
      %s71 = scalar_select %p68, %s69, %s70
      %p74 = pneg %p68
      %p75 = scmp.eq.s32.totalorder %s17, 1
      %p76 = por %p74, %p75
      %p77 = scmp.ne.s32.totalorder %s69, %s72
      %p78 = scmp.eq.s32.totalorder %s17, 0
      %p79 = por %p77, %p78
      %p80 = scmp.ne.s32.totalorder %s69, %s72
      %p81 = scmp.eq.s32.totalorder %s22, 1
      %p82 = por %p80, %p81
      %p83 = scmp.ne.s32.totalorder %s72, %s73
      %p84 = scmp.eq.s32.totalorder %s22, 0
      %p85 = por %p83, %p84
      %p86 = scmp.ne.s32.totalorder %s72, %s73
      %p87 = scmp.eq.s32.totalorder %s23, 1
      %p88 = por %p86, %p87
      %p90 = scmp.ne.s32.totalorder %s73, %s89
      %p91 = scmp.eq.s32.totalorder %s23, 0
      %p92 = por %p90, %p91
      %s93 = ssub.s32 %s24, %s36
      %p94 = scmp.eq.s32.totalorder %s93, 0
      %s96 = sadd.s32 %s95, 1
      %s97 = scalar_select %p94, %s95, %s96
      %p100 = pneg %p94
      %p101 = scmp.eq.s32.totalorder %s17, 1
      %p102 = por %p100, %p101
      %p103 = scmp.ne.s32.totalorder %s95, %s98
      %p104 = scmp.eq.s32.totalorder %s17, 0
      %p105 = por %p103, %p104
      %p106 = scmp.ne.s32.totalorder %s95, %s98
      %p107 = scmp.eq.s32.totalorder %s22, 1
      %p108 = por %p106, %p107
      %p109 = scmp.ne.s32.totalorder %s98, %s99
      %p110 = scmp.eq.s32.totalorder %s22, 0
      %p111 = por %p109, %p110
      %p112 = scmp.ne.s32.totalorder %s98, %s99
      %p113 = scmp.eq.s32.totalorder %s23, 1
      %p114 = por %p112, %p113
      %p116 = scmp.ne.s32.totalorder %s99, %s115
      %p117 = scmp.eq.s32.totalorder %s23, 0
      %p118 = por %p116, %p117
      %p119 = scmp.le.s32.totalorder 1, %s17
      %p120 = scmp.lt.s32.totalorder %s17, 3
      %p121 = pnand %p119, %p120
      %p122 = pneg %p121
      // Predicated region
      $region9: #{tpu_custom_call.1} parent=5 // pred_check
        _
      $region10: #{tpu_custom_call.1} parent=5 // pred_check_branch
        %124 = sbr.rel (%p121) target = $region12
      $region11: #{tpu_custom_call.1} parent=5 // pred_region
        %s125 = ssub.s32 %s17, 1
      $region12: #{tpu_custom_call.1} parent=5 // pred_fallthru
        _
      %p126 = scmp.lt.s32.totalorder %s17, 2
      // Predicated region
      $region13: #{tpu_custom_call.1} parent=5 // pred_check
        %p127 = pneg %p126
      $region14: #{tpu_custom_call.1} parent=5 // pred_check_branch
        %129 = sbr.rel (%p127) target = $region16
      $region15: #{tpu_custom_call.1} parent=5 // pred_region
        // Predicated region
        $region17: #{tpu_custom_call.1} parent=15 // pred_check
          %p130 = pneg %p51
        $region18: #{tpu_custom_call.1} parent=15 // pred_check_branch
          %132 = sbr.rel (%p130) target = $region20
        $region19: #{tpu_custom_call.1} parent=15 // pred_region
          %s133 = sand.u32 %s41, 1
          %s134 = scalar_lea.sflag [#allocation5], %s133
          %s135 = sand.u32 %s41, 1
          %s136 = smul.addr %s135, 8
          %s137 = scalar_lea.vmem [#allocation4], %s136
          %s138 = sadd.s32 %s24, %s25
          %s140 = ssub.s32 128, 128
          %141 = vsyncadd %s134, %s140
          %s142 = smul.addr %s138, 128
          %s143 = scalar_lea.hbm %s0, %s142
          %s145 = sshll.u32 %s137, 4
          %s146 = int_to_ptr.vmem [resolvable:$true] %s145
          %148 = dma.hbm_to_vmem [thread:$0]  %s143, 128, %s146, %s134
        $region20: #{tpu_custom_call.1} parent=15 // pred_fallthru
          _
        // Predicated region
        $region21: #{tpu_custom_call.1} parent=15 // pred_check
          %p149 = pneg %p79
        $region22: #{tpu_custom_call.1} parent=15 // pred_check_branch
          %151 = sbr.rel (%p149) target = $region24
        $region23: #{tpu_custom_call.1} parent=15 // pred_region
          %s152 = sand.u32 %s69, 1
          %s153 = scalar_lea.sflag [#allocation8], %s152
          %s154 = sand.u32 %s69, 1
          %s155 = smul.addr %s154, 8
          %s156 = scalar_lea.vmem [#allocation7], %s155
          %s157 = sadd.s32 %s24, %s25
          %s159 = ssub.s32 128, 128
          %160 = vsyncadd %s153, %s159
          %s161 = smul.addr %s157, 128
          %s162 = scalar_lea.hbm %s1, %s161
          %s164 = sshll.u32 %s156, 4
          %s165 = int_to_ptr.vmem [resolvable:$true] %s164
          %167 = dma.hbm_to_vmem [thread:$0]  %s162, 128, %s165, %s153
        $region24: #{tpu_custom_call.1} parent=15 // pred_fallthru
          _
      $region16: #{tpu_custom_call.1} parent=5 // pred_fallthru
        _
      %p168 = scmp.le.s32.totalorder 1, %s17
      %p169 = scmp.lt.s32.totalorder %s17, 3
      %p170 = pnand %p168, %p169
      %p171 = pneg %p170
      // Predicated region
      $region25: #{tpu_custom_call.1} parent=5 // pred_check
        _
      $region26: #{tpu_custom_call.1} parent=5 // pred_check_branch
        %173 = sbr.rel (%p170) target = $region28
      $region27: #{tpu_custom_call.1} parent=5 // pred_region
        %s174 = ssub.s32 %s17, 1
        %s175 = sand.u32 %s44, 1
        %s176 = scalar_lea.sflag [#allocation5], %s175
        %s177 = sand.u32 %s44, 1
        %s178 = smul.addr %s177, 8
        %s179 = scalar_lea.vmem [#allocation4], %s178
        // Predicated region
        $region29: #{tpu_custom_call.1} parent=27 // pred_check
          %p180 = pneg %p57
        $region30: #{tpu_custom_call.1} parent=27 // pred_check_branch
          %182 = sbr.rel (%p180) target = $region32
        $region31: #{tpu_custom_call.1} parent=27 // pred_region
          %183 = dma.done %s176, 128
        $region32: #{tpu_custom_call.1} parent=27 // pred_fallthru
          _
        %s184 = sand.u32 %s72, 1
        %s185 = scalar_lea.sflag [#allocation8], %s184
        %s186 = sand.u32 %s72, 1
        %s187 = smul.addr %s186, 8
        %s188 = scalar_lea.vmem [#allocation7], %s187
        // Predicated region
        $region33: #{tpu_custom_call.1} parent=27 // pred_check
          %p189 = pneg %p85
        $region34: #{tpu_custom_call.1} parent=27 // pred_check_branch
          %191 = sbr.rel (%p189) target = $region36
        $region35: #{tpu_custom_call.1} parent=27 // pred_region
          %192 = dma.done %s185, 128
        $region36: #{tpu_custom_call.1} parent=27 // pred_fallthru
          _
        %s193 = sand.u32 %s44, 1
        %s194 = scalar_lea.sflag [#allocation5], %s193
        %s195 = sand.u32 %s44, 1
        %s196 = smul.addr %s195, 8
        %s197 = scalar_lea.vmem [#allocation4], %s196
        %p198 = pneg %p57
        %p199 = pneg %p54
        %s200 = sand.u32 %s72, 1
        %s201 = scalar_lea.sflag [#allocation8], %s200
        %s202 = sand.u32 %s72, 1
        %s203 = smul.addr %s202, 8
        %s204 = scalar_lea.vmem [#allocation7], %s203
        %p205 = pneg %p85
        %p206 = pneg %p82
        %p207 = pneg %p111
        %p208 = pneg %p108
        %s209 = sand.u32 %s98, 1
        %s210 = scalar_lea.sflag [#allocation6], %s209
        %s211 = sand.u32 %s98, 1
        %s212 = smul.addr %s211, 8
        %s213 = scalar_lea.vmem [#allocation9], %s212
        %s214 = sadd.s32 %s26, %s27
        %s215 = sadd.s32 %s26, %s27
        %p216 = scmp.eq.s32.totalorder %s27, 0
        // Predicated region
        $region37: #{tpu_custom_call.1} parent=27 // pred_check
          %p217 = pneg %p216
        $region38: #{tpu_custom_call.1} parent=27 // pred_check_branch
          %219 = sbr.rel (%p217) target = $region40
        $region39: #{tpu_custom_call.1} parent=27 // pred_region
          %220 = vst [vmem:[#allocation2] sm:$0xff] 0.0
          %221 = vst [vmem:[#allocation3] sm:$0xff] 0.0
        $region40: #{tpu_custom_call.1} parent=27 // pred_fallthru
          _
        %v222 = vld [vmem:[%s179] sm:$0xff]
        %v223 = vld [vmem:[%s188] sm:$0xff]
        %v224 = vld [vmem:[#allocation2] sm:$0xff]
        %v225 = vmul.f32 %v222, %v223
        %v226 = vadd.f32 %v224, %v225
        %227 = vst [vmem:[#allocation2] sm:$0xff] %v226
        %v228 = vld [vmem:[#allocation3] sm:$0xff]
        %v229 = vadd.f32 %v222, %v223
        %v230 = vadd.f32 %v228, %v229
        %231 = vst [vmem:[#allocation3] sm:$0xff] %v230
        // Predicated region
        $region41: #{tpu_custom_call.1} parent=27 // pred_check
          %p232 = pneg %p216
        $region42: #{tpu_custom_call.1} parent=27 // pred_check_branch
          %234 = sbr.rel (%p232) target = $region44
        $region43: #{tpu_custom_call.1} parent=27 // pred_region
          %v235 = vld [vmem:[#allocation2] sm:$0xff]
          %236 = vadd.xlane.f32.xlu0 %v235
          %v237 = vpop.xlane.xlu0 %236
          %v238 = vrot.slane %v237, 4
          %v239 = vadd.f32 %v237, %v238
          %v240 = vrot.slane %v239, 2
          %v241 = vadd.f32 %v239, %v240
          %v242 = vrot.slane %v241, 1
          %v243 = vadd.f32 %v241, %v242
          %s244 = vtos %v243
          %v245 = vld [vmem:[#allocation3] sm:$0xff]
          %246 = vadd.xlane.f32.xlu0 %v245
          %v247 = vpop.xlane.xlu0 %246
          %v248 = vrot.slane %v247, 4
          %v249 = vadd.f32 %v247, %v248
          %v250 = vrot.slane %v249, 2
          %v251 = vadd.f32 %v249, %v250
          %v252 = vrot.slane %v251, 1
          %v253 = vadd.f32 %v251, %v252
          %s254 = vtos %v253
          %v255 = vlaneseq
          %v256 = vand.u32 %v255, 127
          %vm257 = vcmp.eq.s32.totalorder %v256, 0
          %vm258 = vcmp.eq.s32.totalorder %v256, 1
          %v259 = vstv %s254
          %v260 = vsel %vm258, %v259, 0.0
          %v261 = vstv %s244
          %v262 = vsel %vm257, %v261, %v260
          %263 = vst [vmem:[%s213] sm:$0xff] %v262
        $region44: #{tpu_custom_call.1} parent=27 // pred_fallthru
          _
        %s264 = sand.u32 %s98, 1
        %s265 = scalar_lea.sflag [#allocation6], %s264
        %s266 = sand.u32 %s98, 1
        %s267 = smul.addr %s266, 8
        %s268 = scalar_lea.vmem [#allocation9], %s267
        // Predicated region
        $region45: #{tpu_custom_call.1} parent=27 // pred_check
          %p269 = pneg %p108
        $region46: #{tpu_custom_call.1} parent=27 // pred_check_branch
          %271 = sbr.rel (%p269) target = $region48
        $region47: #{tpu_custom_call.1} parent=27 // pred_region
          %s273 = ssub.s32 128, 128
          %274 = vsyncadd %s265, %s273
          %s275 = smul.addr %s26, 128
          %s276 = scalar_lea.hbm %s2, %s275
          %s278 = sshll.u32 %s268, 4
          %s279 = int_to_ptr.vmem [resolvable:$true] %s278
          %281 = dma.vmem_to_hbm [thread:$0]  %s279, 128, %s276, %s265
        $region48: #{tpu_custom_call.1} parent=27 // pred_fallthru
          _
      $region28: #{tpu_custom_call.1} parent=5 // pred_fallthru
        _
      %p282 = scmp.le.s32.totalorder 2, %s17
      // Predicated region
      $region49: #{tpu_custom_call.1} parent=5 // pred_check
        %p283 = pneg %p282
      $region50: #{tpu_custom_call.1} parent=5 // pred_check_branch
        %285 = sbr.rel (%p283) target = $region52
      $region51: #{tpu_custom_call.1} parent=5 // pred_region
        %s286 = ssub.s32 %s17, 2
        // Predicated region
        $region53: #{tpu_custom_call.1} parent=51 // pred_check
          %p287 = pneg %p114
        $region54: #{tpu_custom_call.1} parent=51 // pred_check_branch
          %289 = sbr.rel (%p287) target = $region56
        $region55: #{tpu_custom_call.1} parent=51 // pred_region
          %s290 = sand.u32 %s99, 1
          %s291 = scalar_lea.sflag [#allocation6], %s290
          %s292 = sand.u32 %s99, 1
          %s293 = smul.addr %s292, 8
          %s294 = scalar_lea.vmem [#allocation9], %s293
          %295 = dma.done %s291, 128
        $region56: #{tpu_custom_call.1} parent=51 // pred_fallthru
          _
      $region52: #{tpu_custom_call.1} parent=5 // pred_fallthru
        _
    $region6: #{tpu_custom_call.1} parent=1 // loop_footer
      %s21 = sadd.s32 1, %s17
    $region7: #{tpu_custom_call.1} parent=1 // loop_footer_branch
      %16 = sbr.rel target = $region3
    $region8: #{tpu_custom_call.1} parent=1 // loop_exit
      _
    %296 = vsyncpa [#allocation5], 1
    %s297 = scalar_lea.sflag [#allocation5], 1
    %298 = vsyncpa %s297, 1
    %299 = vsyncpa [#allocation8], 1
    %s300 = scalar_lea.sflag [#allocation8], 1
    %301 = vsyncpa %s300, 1
    %302 = vsyncpa [#allocation6], 1
    %s303 = scalar_lea.sflag [#allocation6], 1
    %304 = vsyncpa %s303, 1

</llo_original>
